<compile_context>
chip_gen: v6e
topology: v6e:2x2x1
jax: 0.10.0
libtpu: 0.0.40
codegen_flags: <defaults>
</compile_context>

<pallas_src>
import functools

import jax
import jax.numpy as jnp
from jax.experimental import pallas as pl
from jax.experimental.pallas import tpu as pltpu


def _organ_kernel(x_ref, w_ref, b_ref, logp_ref, h_ref, *, n_disease):
    # One fused MXU matmul: (TILE_B, 64) @ (64, n_disease + code) + bias.
    z = jnp.dot(x_ref[...], w_ref[...], preferred_element_type=jnp.float32) + b_ref[...]

    # ---- branch 1: cols [0, n_disease) -> log_softmax(dim=1) ----
    logits = z[:, :n_disease]
    m = jnp.max(logits, axis=1, keepdims=True)
    shifted = logits - m
    lse = jnp.log(jnp.sum(jnp.exp(shifted), axis=1, keepdims=True))
    logp_ref[...] = (shifted - lse).astype(logp_ref.dtype)

    # ---- branch 2: cols [n_disease, n_disease + code) -> tanh ----
    h_ref[...] = jnp.tanh(z[:, n_disease:]).astype(h_ref.dtype)


def _round_up(v, m):
    return (v + m - 1) // m * m


def organ_forward(x, w1, b1, w2, b2, *, tile_b=1024):
    """x: (B, 64); w1: (64, nDisease); b1: (1, nDisease); w2: (64, code); b2: (1, code).

    Returns (log_softmax(x @ w1 + b1), tanh(x @ w2 + b2)).
    """
    B, K = x.shape
    n_disease = w1.shape[1]
    code = w2.shape[1]
    n_out = n_disease + code

    # Fuse the two small matmuls into a single MXU call.
    w = jnp.concatenate([w1, w2], axis=1)  # (K, n_out)
    b = jnp.concatenate([b1, b2], axis=1)  # (1, n_out)

    # Batch tile: multiple of 8 (sublane), capped for VMEM (safe on v5e/v6e/v7x).
    tb = min(tile_b, _round_up(B, 8))
    tb = _round_up(tb, 8)
    b_pad = _round_up(B, tb)
    x_in = jnp.pad(x, ((0, b_pad - B), (0, 0))) if b_pad != B else x
    grid = (b_pad // tb,)

    kernel = functools.partial(_organ_kernel, n_disease=n_disease)

    logp, h = pl.pallas_call(
        kernel,
        out_shape=(
            jax.ShapeDtypeStruct((b_pad, n_disease), jnp.float32),
            jax.ShapeDtypeStruct((b_pad, code), jnp.float32),
        ),
        grid=grid,
        in_specs=[
            pl.BlockSpec((tb, K), lambda i: (i, 0)),        # tiled over batch
            pl.BlockSpec((K, n_out), lambda i: (0, 0)),      # full weights each step
            pl.BlockSpec((1, n_out), lambda i: (0, 0)),      # full bias each step
        ],
        out_specs=(
            pl.BlockSpec((tb, n_disease), lambda i: (i, 0)),
            pl.BlockSpec((tb, code), lambda i: (i, 0)),
        ),
        compiler_params=pltpu.CompilerParams(
            dimension_semantics=("parallel",),               # shard batch across TCs (v7x)
        ),
    )(x_in, w, b)

    if b_pad != B:
        logp = logp[:B]
        h = h[:B]
    return logp, h


def init_params(key, in_features, n_disease, code):
    # Deterministic init mimicking PyTorch's uniform(-1/sqrt(fan_in), 1/sqrt(fan_in)).
    k1, k2, k3, k4 = jax.random.split(key, 4)
    bound = 1.0 / jnp.sqrt(jnp.float32(in_features))
    w1 = jax.random.uniform(k1, (in_features, n_disease), jnp.float32, -bound, bound)
    b1 = jax.random.uniform(k2, (1, n_disease), jnp.float32, -bound, bound)
    w2 = jax.random.uniform(k3, (in_features, code), jnp.float32, -bound, bound)
    b2 = jax.random.uniform(k4, (1, code), jnp.float32, -bound, bound)
    return w1, b1, w2, b2


def _reference(x, w1, b1, w2, b2):
    logits = x @ w1 + b1
    return jax.nn.log_softmax(logits, axis=1), jnp.tanh(x @ w2 + b2)


if __name__ == "__main__":
    key = jax.random.PRNGKey(0)
    kx, kx2, kp = jax.random.split(key, 3)

    B, IN, N_DISEASE, CODE = 8, 64, 16, 32
    x = jax.random.normal(kx, (B, IN), jnp.float32)
    w1, b1, w2, b2 = init_params(kp, IN, N_DISEASE, CODE)

    # Primary run: small batch, single grid step.
    logp, h = organ_forward(x, w1, b1, w2, b2)
    jax.block_until_ready((logp, h))
    logp_ref, h_ref = _reference(x, w1, b1, w2, b2)
    assert jnp.allclose(logp, logp_ref, atol=1e-5), "log_softmax branch mismatch"
    assert jnp.allclose(h, h_ref, atol=1e-5), "tanh branch mismatch"

    # Secondary run: exercises multi-step grid + batch padding (B not a tile multiple).
    B2 = 20
    x2 = jax.random.normal(kx2, (B2, IN), jnp.float32)
    logp2, h2 = organ_forward(x2, w1, b1, w2, b2, tile_b=8)
    jax.block_until_ready((logp2, h2))
    logp2_ref, h2_ref = _reference(x2, w1, b1, w2, b2)
    assert jnp.allclose(logp2, logp2_ref, atol=1e-5), "tiled log_softmax mismatch"
    assert jnp.allclose(h2, h2_ref, atol=1e-5), "tiled tanh mismatch"

    print("KERNEL_OK")
</pallas_src>

<mosaic_0001>
module attributes {stable_mosaic.version = 11 : i64} {
  func.func @_organ_kernel(%arg0: i32, %arg1: memref<8x64xf32, #tpu.memory_space<vmem>>, %arg2: memref<64x48xf32, #tpu.memory_space<vmem>>, %arg3: memref<1x48xf32, #tpu.memory_space<vmem>>, %arg4: memref<8x16xf32, #tpu.memory_space<vmem>>, %arg5: memref<8x32xf32, #tpu.memory_space<vmem>>) attributes {dimension_semantics = [#tpu.dimension_semantics<parallel>], iteration_bounds = array<i64: 1>, scalar_prefetch = 0 : i64, scratch_operands = 0 : i64, tpu.core_type = #tpu.core_type<tc>, window_params = [{transform_indices = @transform_0, window_bounds = array<i64: 8, 64>}, {pipeline_mode = #tpu.pipeline_mode<synchronous>, transform_indices = @transform_1, window_bounds = array<i64: 64, 48>}, {pipeline_mode = #tpu.pipeline_mode<synchronous>, transform_indices = @transform_2, window_bounds = array<i64: 1, 48>}, {transform_indices = @transform_3, window_bounds = array<i64: 8, 16>}, {transform_indices = @transform_4, window_bounds = array<i64: 8, 32>}]} {
    %c0 = arith.constant 0 : index
    %c0_0 = arith.constant 0 : index
    %0 = vector.load %arg1[%c0, %c0_0] : memref<8x64xf32, #tpu.memory_space<vmem>>, vector<8x64xf32>
    %c0_1 = arith.constant 0 : index
    %c0_2 = arith.constant 0 : index
    %1 = vector.load %arg2[%c0_1, %c0_2] : memref<64x48xf32, #tpu.memory_space<vmem>>, vector<64x48xf32>
    %cst = arith.constant dense<0.000000e+00> : vector<8x48xf32>
    %2 = tpu.matmul %0, %1, %cst {dimension_numbers = #tpu.dot_dimension_numbers<[1], [0], [0], [1], [0, 0, 1, 1], [], []>} : vector<8x64xf32>, vector<64x48xf32>, vector<8x48xf32> -> vector<8x48xf32>
    %c0_3 = arith.constant 0 : index
    %c0_4 = arith.constant 0 : index
    %3 = vector.load %arg3[%c0_3, %c0_4] : memref<1x48xf32, #tpu.memory_space<vmem>>, vector<1x48xf32>
    %4 = vector.broadcast %3 : vector<1x48xf32> to vector<8x48xf32>
    %5 = arith.addf %2, %4 : vector<8x48xf32>
    %6 = vector.extract_strided_slice %5 {offsets = [0, 0], sizes = [8, 16], strides = [1, 1]} : vector<8x48xf32> to vector<8x16xf32>
    %cst_5 = arith.constant dense<0xFF800000> : vector<8xf32>
    %7 = vector.multi_reduction <maximumf>, %6, %cst_5 [1] : vector<8x16xf32> to vector<8xf32>
    %8 = vector.shape_cast %7 : vector<8xf32> to vector<8x1xf32>
    %9 = vector.broadcast %8 : vector<8x1xf32> to vector<8x16xf32>
    %10 = arith.subf %6, %9 : vector<8x16xf32>
    %11 = math.exp %10 : vector<8x16xf32>
    %cst_6 = arith.constant dense<0.000000e+00> : vector<8xf32>
    %12 = vector.multi_reduction <add>, %11, %cst_6 [1] : vector<8x16xf32> to vector<8xf32>
    %13 = vector.shape_cast %12 : vector<8xf32> to vector<8x1xf32>
    %14 = math.log %13 : vector<8x1xf32>
    %15 = vector.broadcast %14 : vector<8x1xf32> to vector<8x16xf32>
    %16 = arith.subf %10, %15 : vector<8x16xf32>
    %c0_7 = arith.constant 0 : index
    %c0_8 = arith.constant 0 : index
    %17 = vector.load %arg4[%c0_7, %c0_8] : memref<8x16xf32, #tpu.memory_space<vmem>>, vector<8x16xf32>
    tpu.vector_store %arg4[%c0_7, %c0_8], %16 {strides = array<i32>} : memref<8x16xf32, #tpu.memory_space<vmem>>, vector<8x16xf32>,
    %18 = vector.extract_strided_slice %5 {offsets = [0, 16], sizes = [8, 32], strides = [1, 1]} : vector<8x48xf32> to vector<8x32xf32>
    %19 = math.tanh %18 : vector<8x32xf32>
    %c0_9 = arith.constant 0 : index
    %c0_10 = arith.constant 0 : index
    %20 = vector.load %arg5[%c0_9, %c0_10] : memref<8x32xf32, #tpu.memory_space<vmem>>, vector<8x32xf32>
    tpu.vector_store %arg5[%c0_9, %c0_10], %19 {strides = array<i32>} : memref<8x32xf32, #tpu.memory_space<vmem>>, vector<8x32xf32>,
    return
  }
  func.func @transform_0(%arg0: i32) -> (i32, i32) {
    %c0_i32 = arith.constant 0 : i32
    %c0_i32_0 = arith.constant 0 : i32
    return %arg0, %c0_i32 : i32, i32
  }
  func.func @transform_1(%arg0: i32) -> (i32, i32) {
    %c0_i32 = arith.constant 0 : i32
    %c0_i32_0 = arith.constant 0 : i32
    %c0_i32_1 = arith.constant 0 : i32
    return %c0_i32, %c0_i32_0 : i32, i32
  }
  func.func @transform_2(%arg0: i32) -> (i32, i32) {
    %c0_i32 = arith.constant 0 : i32
    %c0_i32_0 = arith.constant 0 : i32
    %c0_i32_1 = arith.constant 0 : i32
    return %c0_i32, %c0_i32_0 : i32, i32
  }
  func.func @transform_3(%arg0: i32) -> (i32, i32) {
    %c0_i32 = arith.constant 0 : i32
    %c0_i32_0 = arith.constant 0 : i32
    return %arg0, %c0_i32 : i32, i32
  }
  func.func @transform_4(%arg0: i32) -> (i32, i32) {
    %c0_i32 = arith.constant 0 : i32
    %c0_i32_0 = arith.constant 0 : i32
    return %arg0, %c0_i32 : i32, i32
  }
}

</mosaic_0001>

<llo_original>
// kernel: tpu_custom_call.1
$region0: #{tpu_custom_call.1}
  #allocation0 [shape = 'u32[]', space=smem, size = 0x4, offset = 0x4, fixed_abs, tag = 'smem constant byte address 0x4 - core index']
  #allocation1 [shape = 'u32[144,128]{1,0:T(1,128)}', space=vmem, size = 0x12000, scoped, tag = 'internal scratch']
  %s0 = inlined_call_operand.vmem [shape: f32[8,64], index: 0, kind: input, shape index: {}]
  %s1 = inlined_call_operand.vmem [shape: f32[64,48], index: 1, kind: input, shape index: {}]
  %s2 = inlined_call_operand.vmem [shape: f32[1,48], index: 2, kind: input, shape index: {}]
  %s3 = inlined_call_operand.hbm [shape: f32[8,16], index: 3, kind: output, shape index: {0}]
  %s4 = inlined_call_operand.hbm [shape: f32[8,32], index: 4, kind: output, shape index: {1}]
  %5 = xla_tuple %s3, %s4
  %s6 = sld [smem:[#allocation0]]
  $region30: #{tpu_custom_call.1} parent=0
    _
  %s8 = ssub.s32 1, %s6
  %s9 = scalar_select 0, %s8, %s6
  $region1: #{tpu_custom_call.1} parent=0
    #allocation2 [shape = 'u8[4096]{0}', space=vmem, size = 0x1000, scoped, tag = 'output window, operand 0, single buffered']
    #allocation3 [shape = 's32[1]{0}', space=sflag, size = 0x4, scoped, tag = 'scoped memory for tpu_custom_call.1']
    #allocation4 [shape = 'u8[4096]{0}', space=vmem, size = 0x1000, scoped, tag = 'output window, operand 1, single buffered']
    #allocation5 [shape = 's32[1]{0}', space=sflag, size = 0x4, scoped, tag = 'scoped memory for tpu_custom_call.1']
    %10 = vsyncpa [#allocation3], 0
    %11 = vsyncpa [#allocation5], 0
    // Predicated region
    $region2: #{tpu_custom_call.1} parent=1 // pred_check
      _
    $region3: #{tpu_custom_call.1} parent=1 // pred_check_branch
      %13 = sbr.rel (0) target = $region5
    $region4: #{tpu_custom_call.1} parent=1 // pred_region
      _
    $region5: #{tpu_custom_call.1} parent=1 // pred_fallthru
      _
    // Predicated region
    $region6: #{tpu_custom_call.1} parent=1 // pred_check
      _
    $region7: #{tpu_custom_call.1} parent=1 // pred_check_branch
      %15 = sbr.rel (0) target = $region9
    $region8: #{tpu_custom_call.1} parent=1 // pred_region
      _
    $region9: #{tpu_custom_call.1} parent=1 // pred_fallthru
      _
    // Predicated region
    $region10: #{tpu_custom_call.1} parent=1 // pred_check
      _
    $region11: #{tpu_custom_call.1} parent=1 // pred_check_branch
      %17 = sbr.rel (0) target = $region13
    $region12: #{tpu_custom_call.1} parent=1 // pred_region
      _
    $region13: #{tpu_custom_call.1} parent=1 // pred_fallthru
      _
    %v18 = vld [vmem:[%s0] sm:$0xff]
    %v19 = vld [vmem:[%s1] sm:$0xff]
    %v20 = vld [vmem:[%s1 + $0x8] sm:$0xff]
    %v21 = vld [vmem:[%s1 + $0x10] sm:$0xff]
    %v22 = vld [vmem:[%s1 + $0x18] sm:$0xff]
    %v23 = vld [vmem:[%s1 + $0x20] sm:$0xff]
    %v24 = vld [vmem:[%s1 + $0x28] sm:$0xff]
    %v25 = vld [vmem:[%s1 + $0x30] sm:$0xff]
    %v26 = vld [vmem:[%s1 + $0x38] sm:$0xff]
    %v27 = vld [vmem:[%s2] sm:$0x1]
    %v29 = vlaneseq
    %v30 = vshrl.u32 %v29, 7
    %v31 = vsub.s32 0, %v30
    %v32 = vrot.slane %v27, %v31
    %vm34 = vcmask 523264
    %v36 = vsel %vm34, %v18, 0
    %38 = vmatprep.subr.mxu0 0.0
    %39 = vmatpush1.msra.mxu0 0.0
    %40 = vmatprep.subr.mxu0 0.0
    %41 = vmatpush1.msra.mxu0 0.0
    %42 = vmatprep.subr.mxu0 0.0
    %43 = vmatpush1.msra.mxu0 0.0
    %44 = vmatprep.subr.mxu0 0.0
    %45 = vmatpush1.msra.mxu0 0.0
    %46 = vmatprep.subr.mxu0 0.0
    %47 = vmatpush1.msra.mxu0 0.0
    %48 = vmatprep.subr.mxu0 0.0
    %49 = vmatpush1.msra.mxu0 0.0
    %50 = vmatprep.subr.mxu0 0.0
    %51 = vmatpush1.msra.mxu0 0.0
    %52 = vmatprep.subr.mxu0 0.0
    %53 = vmatpush1.msra.mxu0 0.0
    %54 = vmatprep.subr.mxu0 0.0
    %55 = vmatpush1.msra.mxu0 %v26
    %56 = vmatprep.subr.mxu0 0.0
    %57 = vmatpush1.msra.mxu0 %v25
    %58 = vmatprep.subr.mxu0 0.0
    %59 = vmatpush1.msra.mxu0 %v24
    %60 = vmatprep.subr.mxu0 0.0
    %61 = vmatpush1.msra.mxu0 %v23
    %62 = vmatprep.subr.mxu0 0.0
    %63 = vmatpush1.msra.mxu0 %v22
    %64 = vmatprep.subr.mxu0 0.0
    %65 = vmatpush1.msra.mxu0 %v21
    %66 = vmatprep.subr.mxu0 0.0
    %67 = vmatpush1.msra.mxu0 %v20
    %68 = vmatprep.subr.mxu0 0.0
    %69 = vmatpush1.msra.mxu0 %v19
    %70 = vmatprep.subr.mxu0 0.0
    %71 = vmatpush2.msra.mxu0 0.0
    %72 = vmatprep.subr.mxu0 0.0
    %73 = vmatpush2.msra.mxu0 0.0
    %74 = vmatprep.subr.mxu0 0.0
    %75 = vmatpush2.msra.mxu0 0.0
    %76 = vmatprep.subr.mxu0 0.0
    %77 = vmatpush2.msra.mxu0 0.0
    %78 = vmatprep.subr.mxu0 0.0
    %79 = vmatpush2.msra.mxu0 0.0
    %80 = vmatprep.subr.mxu0 0.0
    %81 = vmatpush2.msra.mxu0 0.0
    %82 = vmatprep.subr.mxu0 0.0
    %83 = vmatpush2.msra.mxu0 0.0
    %84 = vmatprep.subr.mxu0 0.0
    %85 = vmatpush2.msra.mxu0 0.0
    %86 = vmatprep.subr.mxu0 0.0
    %87 = vmatpush2.msra.mxu0 0.0
    %88 = vmatprep.subr.mxu0 0.0
    %89 = vmatpush2.msra.mxu0 0.0
    %90 = vmatprep.subr.mxu0 0.0
    %91 = vmatpush2.msra.mxu0 0.0
    %92 = vmatprep.subr.mxu0 0.0
    %93 = vmatpush2.msra.mxu0 0.0
    %94 = vmatprep.subr.mxu0 0.0
    %95 = vmatpush2.msra.mxu0 0.0
    %96 = vmatprep.subr.mxu0 0.0
    %97 = vmatpush2.msra.mxu0 0.0
    %98 = vmatprep.subr.mxu0 0.0
    %99 = vmatpush2.msra.mxu0 0.0
    %100 = vmatprep.subr.mxu0 0.0
    %101 = vmatpush2.msra.mxu0 0.0
    %102 = vmatprep.mubr.f32.mxu0 0.0
    %103 = vmatmul.mubr.f32.gmra.mxu0 %v36
    %v104 = vpop.f32.mrf.mxu0
    %v105 = vadd.f32 %v32, %v104
    %v106 = vpop.f32.mrf.mxu0
    %107 = vdwg.mxu0
    %vm108 = vcmask 130048
    %v109 = vsel %vm108, %v105, -inf
    %110 = vmax.xlane.f32.xlu0 %v109
    %v111 = vpop.xlane.xlu0 %110
    %v112 = vsub.f32 %v105, %v111
    %v113 = vmul.f32 %v112, 1.442695
    %v114 = vpow.pop %v113
    %v115 = vsel %vm108, %v114, 0.0
    %116 = vadd.xlane.f32.xlu0 %v115
    %v117 = vpop.xlane.xlu0 %116
    %v118 = vlog2.pop %v117
    %v119 = vmul.f32 %v118, 0.6931472
    %v120 = vsub.f32 %v112, %v119
    %121 = vst.msk [vmem:[#allocation2] sm:$0xff] %vm108, %v120
    %v122 = vtanh.pop %v105
    %124 = vrot.lane.b32.xlu0 %v122, 112
    %v125 = vpop.permute.xlu0 %124
    %vm127 = vcmask 261120
    %128 = vst.msk [vmem:[#allocation4] sm:$0xff] %vm127, %v125
    // Predicated region
    $region14: #{tpu_custom_call.1} parent=1 // pred_check
      _
    $region15: #{tpu_custom_call.1} parent=1 // pred_check_branch
      %130 = sbr.rel (0) target = $region17
    $region16: #{tpu_custom_call.1} parent=1 // pred_region
      %s132 = ssub.s32 128, 128
      %133 = vsyncadd [#allocation3], %s132
      %s135 = sshll.u32 [#allocation2], 4
      %s136 = int_to_ptr.vmem [resolvable:$true] %s135
      %138 = dma.vmem_to_hbm [thread:$0]  %s136, 128, %s3, [#allocation3]
    $region17: #{tpu_custom_call.1} parent=1 // pred_fallthru
      _
    // Predicated region
    $region18: #{tpu_custom_call.1} parent=1 // pred_check
      _
    $region19: #{tpu_custom_call.1} parent=1 // pred_check_branch
      %140 = sbr.rel (0) target = $region21
    $region20: #{tpu_custom_call.1} parent=1 // pred_region
      %s142 = ssub.s32 128, 128
      %143 = vsyncadd [#allocation5], %s142
      %s145 = sshll.u32 [#allocation4], 4
      %s146 = int_to_ptr.vmem [resolvable:$true] %s145
      %148 = dma.vmem_to_hbm [thread:$0]  %s146, 128, %s4, [#allocation5]
    $region21: #{tpu_custom_call.1} parent=1 // pred_fallthru
      _
    // Predicated region
    $region22: #{tpu_custom_call.1} parent=1 // pred_check
      _
    $region23: #{tpu_custom_call.1} parent=1 // pred_check_branch
      %150 = sbr.rel (0) target = $region25
    $region24: #{tpu_custom_call.1} parent=1 // pred_region
      %151 = dma.done [#allocation3], 128
    $region25: #{tpu_custom_call.1} parent=1 // pred_fallthru
      _
    // Predicated region
    $region26: #{tpu_custom_call.1} parent=1 // pred_check
      _
    $region27: #{tpu_custom_call.1} parent=1 // pred_check_branch
      %153 = sbr.rel (0) target = $region29
    $region28: #{tpu_custom_call.1} parent=1 // pred_region
      %154 = dma.done [#allocation5], 128
    $region29: #{tpu_custom_call.1} parent=1 // pred_fallthru
      _
    %155 = vsyncpa [#allocation3], 1
    %156 = vsyncpa [#allocation5], 1

</llo_original>
